<compile_context>
chip_gen: v5e
topology: v5e:2x2
jax: 0.10.0
libtpu: 0.0.40
codegen_flags: <defaults>
</compile_context>

<pallas_src>
import functools

import jax
import jax.numpy as jnp
import numpy as np
from jax.experimental import pallas as pl
from jax.experimental.pallas import tpu as pltpu


def caser_kernel(a_ref, ef_ref, wh_ref, bm_ref, wv_ref, wf_ref, fcb_ref, out_ref):
    """One batch tile.

    a_ref  : (bt*L, L*D)  bf16  sliding-window embeddings  A[b*L+t, r*D+d] = Epad[b, t+r, d]
    ef_ref : (bt,   L*D)  bf16  flattened item embeddings  E_flat[b, l*D+d] = E[b, l, d]
    wh_ref : (L*D, n_h*L) bf16  stacked horizontal conv weights (zero rows past each height)
    bm_ref : (L,   n_h*L) f32   conv bias where time position is valid, -1e30 where invalid
    wv_ref : (L*D, D)     bf16  vertical filters folded into fc_w[:n_v*D]
    wf_ref : (n_h*L, D)   bf16  fc_w[n_v*D:]
    fcb_ref: (1, D)       f32   fc bias
    out_ref: (bt, D)      f32   z = relu(o @ fc_w + fc_b)
    """
    bt = ef_ref.shape[0]
    L, F2 = bm_ref.shape

    # ---- all L horizontal convs as ONE MXU matmul, contraction K = L*D ----------
    s = jax.lax.dot_general(a_ref[...], wh_ref[...], (((1,), (0,)), ((), ())),
                            preferred_element_type=jnp.float32)        # (bt*L, F2)
    s = s.reshape(bt, L, F2) + bm_ref[...][None]                       # bias + validity mask
    o_h = jnp.maximum(jnp.max(s, axis=1), 0.0)                         # relu(max-pool over t)

    # ---- fully connected (vertical path already folded into wv) -----------------
    z = (jax.lax.dot_general(ef_ref[...], wv_ref[...], (((1,), (0,)), ((), ())),
                             preferred_element_type=jnp.float32)
         + jax.lax.dot_general(o_h.astype(wf_ref.dtype), wf_ref[...],
                               (((1,), (0,)), ((), ())),
                               preferred_element_type=jnp.float32)
         + fcb_ref[...])
    out_ref[...] = jnp.maximum(z, 0.0)                                 # single lane-dense store


def prepare_caser_weights(vert, hw_list, hb_list, fc_w, fc_b):
    """One-time fold of the module parameters into the kernel's fused weight layout."""
    L, n_v = vert.shape
    n_h = hw_list[0].shape[0]
    D = fc_w.shape[1]
    F2 = n_h * L

    # Stacked horizontal conv weights: Wh[r*D + d, i*n_h + c] = hw_i[c, 0, r, d] (0 if r > i).
    wh = jnp.zeros((L, F2, D), jnp.float32)
    for i in range(L):
        w_i = jnp.transpose(hw_list[i][:, 0], (1, 0, 2))               # (i+1, n_h, D)
        wh = wh.at[:i + 1, i * n_h:(i + 1) * n_h, :].set(w_i)
    wh = jnp.transpose(wh, (0, 2, 1)).reshape(L * D, F2)

    # Bias + valid-time mask in one additive tensor: filter i is valid for t <= L-1-i.
    hb = jnp.concatenate(hb_list, axis=0)                              # (F2,) order i*n_h+c
    t = jnp.arange(L)[:, None]
    fi = (jnp.arange(F2) // n_h)[None, :]
    bm = jnp.where(t <= (L - 1) - fi, hb[None, :], -1e30).astype(jnp.float32)

    # Fold vertical filters into the FC weight: o_v @ fc_w[:n_v*D] == E_flat @ wv.
    wv = jnp.einsum('lv,vde->lde', vert,
                    fc_w[:n_v * D].reshape(n_v, D, D)).reshape(L * D, D)
    wf = fc_w[n_v * D:]                                                # (F2, D)

    return (wh.astype(jnp.bfloat16), bm, wv.astype(jnp.bfloat16),
            wf.astype(jnp.bfloat16), fc_b.reshape(1, D).astype(jnp.float32))


@functools.partial(jax.jit, static_argnames=("batch_tile",))
def caser_query_encoder(E, P_u, weights, *, batch_tile=64):
    """E: (B, L, D) item-sequence embeddings;  P_u: (B, D) user embeddings."""
    wh, bm, wv, wf, fcb = weights
    B, L, D = E.shape
    F2 = bm.shape[1]

    bt = min(batch_tile, B)
    B_pad = -(-B // bt) * bt
    if B_pad != B:
        E = jnp.concatenate([E, jnp.zeros((B_pad - B, L, D), E.dtype)], axis=0)

    # Sliding-window matrix A[b*L+t, r*D+d] = Epad[b, t+r, d] (zero time padding), lane-dense.
    Epad = jnp.concatenate([E, jnp.zeros((B_pad, L - 1, D), E.dtype)], axis=1)
    win = jnp.arange(L)[:, None] + jnp.arange(L)[None, :]              # (t, r) -> t + r
    A = Epad[:, win, :].reshape(B_pad * L, L * D).astype(jnp.bfloat16)
    E_flat = E.reshape(B_pad, L * D).astype(jnp.bfloat16)

    z = pl.pallas_call(
        caser_kernel,
        out_shape=jax.ShapeDtypeStruct((B_pad, D), jnp.float32),
        grid=(B_pad // bt,),
        in_specs=[
            pl.BlockSpec((bt * L, L * D), lambda i: (i, 0)),           # A (batch-tiled)
            pl.BlockSpec((bt, L * D), lambda i: (i, 0)),               # E_flat (batch-tiled)
            pl.BlockSpec((L * D, F2), lambda i: (0, 0)),               # wh (resident)
            pl.BlockSpec((L, F2), lambda i: (0, 0)),                   # bias/mask (resident)
            pl.BlockSpec((L * D, D), lambda i: (0, 0)),                # wv (resident)
            pl.BlockSpec((F2, D), lambda i: (0, 0)),                   # wf (resident)
            pl.BlockSpec((1, D), lambda i: (0, 0)),                    # fc bias (resident)
        ],
        out_specs=pl.BlockSpec((bt, D), lambda i: (i, 0)),
        compiler_params=pltpu.CompilerParams(
            dimension_semantics=("parallel",),
            vmem_limit_bytes=32 * 1024 * 1024),
    )(A, E_flat, wh, bm, wv, wf, fcb)

    # P_u passthrough / concat stays in plain JAX (no wasted DMA through the kernel).
    return jnp.concatenate([z[:B], P_u], axis=1)


if __name__ == "__main__":
    # Small shapes consistent with the module.
    B, D, L = 4, 32, 8          # batch, embed_dim, max_seq_len
    n_v, n_h = 4, 4
    num_users, num_items = 10, 20

    key = jax.random.PRNGKey(0)
    keys = jax.random.split(key, 7 + 2 * L)

    # ---- deterministic parameter init (synthetic; padding_idx=0 rows are zero)
    user_emb = (0.1 * jax.random.normal(keys[0], (num_users, D), jnp.float32)).at[0].set(0.0)
    item_emb = (0.1 * jax.random.normal(keys[1], (num_items, D), jnp.float32)).at[0].set(0.0)
    vert = 0.1 * jax.random.normal(keys[2], (L, n_v), jnp.float32)
    fc_w = 0.1 * jax.random.normal(keys[3], (n_v * D + n_h * L, D), jnp.float32)
    fc_b = 0.1 * jax.random.normal(keys[4], (D,), jnp.float32)
    # Conv2d(1, n_h, kernel_size=(h, D)) weights / biases for h = 1..L
    hw_list = [0.1 * jax.random.normal(keys[5 + i], (n_h, 1, i + 1, D), jnp.float32)
               for i in range(L)]
    hb_list = [0.1 * jax.random.normal(keys[5 + L + i], (n_h,), jnp.float32)
               for i in range(L)]

    user_ids = jax.random.randint(keys[5 + 2 * L], (B,), 0, num_users)
    item_seq = jax.random.randint(keys[6 + 2 * L], (B, L), 0, num_items)

    # ---- glue: embedding gathers (nn.Embedding) stay in plain JAX
    P_u = user_emb[user_ids]                                           # (B, D)
    E = item_emb[item_seq]                                             # (B, L, D)

    weights = prepare_caser_weights(vert, hw_list, hb_list, fc_w, fc_b)
    out = jax.block_until_ready(caser_query_encoder(E, P_u, weights))

    # ---- pure-JAX reference mirroring the PyTorch forward
    def reference(E, P_u):
        o_v = jnp.einsum('bld,lv->bvd', E, vert,
                         precision=jax.lax.Precision.HIGHEST).reshape(B, n_v * D)
        o_h_parts = []
        for i in range(L):
            h = i + 1
            w = hw_list[i][:, 0]                                       # (n_h, h, D)
            conv = jnp.stack(
                [jnp.einsum('bhd,chd->bc', E[:, t:t + h, :], w,
                            precision=jax.lax.Precision.HIGHEST)
                 for t in range(L - h + 1)], axis=-1) + hb_list[i][None, :, None]
            conv = jnp.maximum(conv, 0.0)
            o_h_parts.append(jnp.max(conv, axis=-1))
        o_h = jnp.concatenate(o_h_parts, axis=1)
        o = jnp.concatenate([o_v, o_h], axis=1)
        z = jnp.maximum(jnp.dot(o, fc_w, precision=jax.lax.Precision.HIGHEST) + fc_b, 0.0)
        return jnp.concatenate([z, P_u], axis=1)

    ref = jax.block_until_ready(reference(E, P_u))
    # bf16 MXU inputs with f32 accumulation: 5e-3 tolerance (as in the original check).
    np.testing.assert_allclose(np.asarray(out), np.asarray(ref), rtol=5e-3, atol=5e-3)
    print("KERNEL_OK")
</pallas_src>

<mosaic_0001>
module attributes {stable_mosaic.version = 11 : i64} {
  func.func @caser_kernel(%arg0: i32, %arg1: memref<32x256xbf16, #tpu.memory_space<vmem>>, %arg2: memref<4x256xbf16, #tpu.memory_space<vmem>>, %arg3: memref<256x32xbf16, #tpu.memory_space<vmem>>, %arg4: memref<8x32xf32, #tpu.memory_space<vmem>>, %arg5: memref<256x32xbf16, #tpu.memory_space<vmem>>, %arg6: memref<32x32xbf16, #tpu.memory_space<vmem>>, %arg7: memref<1x32xf32, #tpu.memory_space<vmem>>, %arg8: memref<4x32xf32, #tpu.memory_space<vmem>>) attributes {dimension_semantics = [#tpu.dimension_semantics<parallel>], iteration_bounds = array<i64: 1>, scalar_prefetch = 0 : i64, scratch_operands = 0 : i64, tpu.core_type = #tpu.core_type<tc>, window_params = [{transform_indices = @transform_0, window_bounds = array<i64: 32, 256>}, {transform_indices = @transform_1, window_bounds = array<i64: 4, 256>}, {pipeline_mode = #tpu.pipeline_mode<synchronous>, transform_indices = @transform_2, window_bounds = array<i64: 256, 32>}, {pipeline_mode = #tpu.pipeline_mode<synchronous>, transform_indices = @transform_3, window_bounds = array<i64: 8, 32>}, {pipeline_mode = #tpu.pipeline_mode<synchronous>, transform_indices = @transform_4, window_bounds = array<i64: 256, 32>}, {pipeline_mode = #tpu.pipeline_mode<synchronous>, transform_indices = @transform_5, window_bounds = array<i64: 32, 32>}, {pipeline_mode = #tpu.pipeline_mode<synchronous>, transform_indices = @transform_6, window_bounds = array<i64: 1, 32>}, {transform_indices = @transform_7, window_bounds = array<i64: 4, 32>}]} {
    %c0 = arith.constant 0 : index
    %c0_0 = arith.constant 0 : index
    %0 = vector.load %arg1[%c0, %c0_0] : memref<32x256xbf16, #tpu.memory_space<vmem>>, vector<32x256xbf16>
    %c0_1 = arith.constant 0 : index
    %c0_2 = arith.constant 0 : index
    %1 = vector.load %arg3[%c0_1, %c0_2] : memref<256x32xbf16, #tpu.memory_space<vmem>>, vector<256x32xbf16>
    %cst = arith.constant dense<0.000000e+00> : vector<32x32xf32>
    %2 = tpu.matmul %0, %1, %cst {dimension_numbers = #tpu.dot_dimension_numbers<[1], [0], [0], [1], [0, 0, 1, 1], [], []>} : vector<32x256xbf16>, vector<256x32xbf16>, vector<32x32xf32> -> vector<32x32xf32>
    %3 = vector.shape_cast %2 : vector<32x32xf32> to vector<4x8x32xf32>
    %c0_3 = arith.constant 0 : index
    %c0_4 = arith.constant 0 : index
    %4 = vector.load %arg4[%c0_3, %c0_4] : memref<8x32xf32, #tpu.memory_space<vmem>>, vector<8x32xf32>
    %5 = vector.shape_cast %4 : vector<8x32xf32> to vector<1x8x32xf32>
    %6 = vector.broadcast %5 : vector<1x8x32xf32> to vector<4x8x32xf32>
    %7 = arith.addf %3, %6 : vector<4x8x32xf32>
    %cst_5 = arith.constant dense<0xFF800000> : vector<4x32xf32>
    %8 = vector.multi_reduction <maximumf>, %7, %cst_5 [1] : vector<4x8x32xf32> to vector<4x32xf32>
    %cst_6 = arith.constant 0.000000e+00 : f32
    %9 = vector.broadcast %cst_6 : f32 to vector<4x32xf32>
    %10 = arith.maximumf %8, %9 : vector<4x32xf32>
    %c0_7 = arith.constant 0 : index
    %c0_8 = arith.constant 0 : index
    %11 = vector.load %arg2[%c0_7, %c0_8] : memref<4x256xbf16, #tpu.memory_space<vmem>>, vector<4x256xbf16>
    %c0_9 = arith.constant 0 : index
    %c0_10 = arith.constant 0 : index
    %12 = vector.load %arg5[%c0_9, %c0_10] : memref<256x32xbf16, #tpu.memory_space<vmem>>, vector<256x32xbf16>
    %cst_11 = arith.constant dense<0.000000e+00> : vector<4x32xf32>
    %13 = tpu.matmul %11, %12, %cst_11 {dimension_numbers = #tpu.dot_dimension_numbers<[1], [0], [0], [1], [0, 0, 1, 1], [], []>} : vector<4x256xbf16>, vector<256x32xbf16>, vector<4x32xf32> -> vector<4x32xf32>
    %14 = arith.truncf %10 : vector<4x32xf32> to vector<4x32xbf16>
    %c0_12 = arith.constant 0 : index
    %c0_13 = arith.constant 0 : index
    %15 = vector.load %arg6[%c0_12, %c0_13] : memref<32x32xbf16, #tpu.memory_space<vmem>>, vector<32x32xbf16>
    %cst_14 = arith.constant dense<0.000000e+00> : vector<4x32xf32>
    %16 = tpu.matmul %14, %15, %cst_14 {dimension_numbers = #tpu.dot_dimension_numbers<[1], [0], [0], [1], [0, 0, 1, 1], [], []>} : vector<4x32xbf16>, vector<32x32xbf16>, vector<4x32xf32> -> vector<4x32xf32>
    %17 = arith.addf %13, %16 : vector<4x32xf32>
    %c0_15 = arith.constant 0 : index
    %c0_16 = arith.constant 0 : index
    %18 = vector.load %arg7[%c0_15, %c0_16] : memref<1x32xf32, #tpu.memory_space<vmem>>, vector<1x32xf32>
    %19 = vector.broadcast %18 : vector<1x32xf32> to vector<4x32xf32>
    %20 = arith.addf %17, %19 : vector<4x32xf32>
    %cst_17 = arith.constant 0.000000e+00 : f32
    %21 = vector.broadcast %cst_17 : f32 to vector<4x32xf32>
    %22 = arith.maximumf %20, %21 : vector<4x32xf32>
    %c0_18 = arith.constant 0 : index
    %c0_19 = arith.constant 0 : index
    %23 = vector.load %arg8[%c0_18, %c0_19] : memref<4x32xf32, #tpu.memory_space<vmem>>, vector<4x32xf32>
    tpu.vector_store %arg8[%c0_18, %c0_19], %22 {strides = array<i32>} : memref<4x32xf32, #tpu.memory_space<vmem>>, vector<4x32xf32>,
    return
  }
  func.func @transform_0(%arg0: i32) -> (i32, i32) {
    %c0_i32 = arith.constant 0 : i32
    %c0_i32_0 = arith.constant 0 : i32
    return %arg0, %c0_i32 : i32, i32
  }
  func.func @transform_1(%arg0: i32) -> (i32, i32) {
    %c0_i32 = arith.constant 0 : i32
    %c0_i32_0 = arith.constant 0 : i32
    return %arg0, %c0_i32 : i32, i32
  }
  func.func @transform_2(%arg0: i32) -> (i32, i32) {
    %c0_i32 = arith.constant 0 : i32
    %c0_i32_0 = arith.constant 0 : i32
    %c0_i32_1 = arith.constant 0 : i32
    return %c0_i32, %c0_i32_0 : i32, i32
  }
  func.func @transform_3(%arg0: i32) -> (i32, i32) {
    %c0_i32 = arith.constant 0 : i32
    %c0_i32_0 = arith.constant 0 : i32
    %c0_i32_1 = arith.constant 0 : i32
    return %c0_i32, %c0_i32_0 : i32, i32
  }
  func.func @transform_4(%arg0: i32) -> (i32, i32) {
    %c0_i32 = arith.constant 0 : i32
    %c0_i32_0 = arith.constant 0 : i32
    %c0_i32_1 = arith.constant 0 : i32
    return %c0_i32, %c0_i32_0 : i32, i32
  }
  func.func @transform_5(%arg0: i32) -> (i32, i32) {
    %c0_i32 = arith.constant 0 : i32
    %c0_i32_0 = arith.constant 0 : i32
    %c0_i32_1 = arith.constant 0 : i32
    return %c0_i32, %c0_i32_0 : i32, i32
  }
  func.func @transform_6(%arg0: i32) -> (i32, i32) {
    %c0_i32 = arith.constant 0 : i32
    %c0_i32_0 = arith.constant 0 : i32
    %c0_i32_1 = arith.constant 0 : i32
    return %c0_i32, %c0_i32_0 : i32, i32
  }
  func.func @transform_7(%arg0: i32) -> (i32, i32) {
    %c0_i32 = arith.constant 0 : i32
    %c0_i32_0 = arith.constant 0 : i32
    return %arg0, %c0_i32 : i32, i32
  }
}

</mosaic_0001>

<llo_original>
// kernel: caser_query_encoder.1
$region0: #{caser_query_encoder.1}
  #allocation0 [shape = 'u32[]', space=smem, size = 0x4, offset = 0x4, fixed_abs, tag = 'smem constant byte address 0x4 - core index']
  #allocation1 [shape = 'u32[72,128]{1,0:T(1,128)}', space=vmem, size = 0x9000, scoped, tag = 'internal scratch']
  %s0 = inlined_call_operand.vmem [shape: bf16[32,256], index: 0, kind: input, shape index: {}]
  %s1 = inlined_call_operand.vmem [shape: bf16[4,256], index: 1, kind: input, shape index: {}]
  %s2 = inlined_call_operand.vmem [shape: bf16[256,32], index: 2, kind: input, shape index: {}]
  %s3 = inlined_call_operand.vmem [shape: f32[8,32], index: 3, kind: input, shape index: {}]
  %s4 = inlined_call_operand.vmem [shape: bf16[256,32], index: 4, kind: input, shape index: {}]
  %s5 = inlined_call_operand.vmem [shape: bf16[32,32], index: 5, kind: input, shape index: {}]
  %s6 = inlined_call_operand.vmem [shape: f32[1,32], index: 6, kind: input, shape index: {}]
  %s7 = inlined_call_operand.vmem [shape: f32[4,32], index: 7, kind: output, shape index: {}]
  %s8 = sld [smem:[#allocation0]]
  $region38: #{caser_query_encoder.1} parent=0
    _
  %s10 = ssub.s32 1, %s8
  %s11 = scalar_select 0, %s10, %s8
  // Predicated region
  $region2: #{caser_query_encoder.1} parent=0 // pred_check
    _
  $region3: #{caser_query_encoder.1} parent=0 // pred_check_branch
    %13 = sbr.rel (0) target = $region5
  $region4: #{caser_query_encoder.1} parent=0 // pred_region
    _
  $region5: #{caser_query_encoder.1} parent=0 // pred_fallthru
    _
  // Predicated region
  $region6: #{caser_query_encoder.1} parent=0 // pred_check
    _
  $region7: #{caser_query_encoder.1} parent=0 // pred_check_branch
    %15 = sbr.rel (0) target = $region9
  $region8: #{caser_query_encoder.1} parent=0 // pred_region
    _
  $region9: #{caser_query_encoder.1} parent=0 // pred_fallthru
    _
  // Predicated region
  $region10: #{caser_query_encoder.1} parent=0 // pred_check
    _
  $region11: #{caser_query_encoder.1} parent=0 // pred_check_branch
    %17 = sbr.rel (0) target = $region13
  $region12: #{caser_query_encoder.1} parent=0 // pred_region
    _
  $region13: #{caser_query_encoder.1} parent=0 // pred_fallthru
    _
  // Predicated region
  $region14: #{caser_query_encoder.1} parent=0 // pred_check
    _
  $region15: #{caser_query_encoder.1} parent=0 // pred_check_branch
    %19 = sbr.rel (0) target = $region17
  $region16: #{caser_query_encoder.1} parent=0 // pred_region
    _
  $region17: #{caser_query_encoder.1} parent=0 // pred_fallthru
    _
  // Predicated region
  $region18: #{caser_query_encoder.1} parent=0 // pred_check
    _
  $region19: #{caser_query_encoder.1} parent=0 // pred_check_branch
    %21 = sbr.rel (0) target = $region21
  $region20: #{caser_query_encoder.1} parent=0 // pred_region
    _
  $region21: #{caser_query_encoder.1} parent=0 // pred_fallthru
    _
  // Predicated region
  $region22: #{caser_query_encoder.1} parent=0 // pred_check
    _
  $region23: #{caser_query_encoder.1} parent=0 // pred_check_branch
    %23 = sbr.rel (0) target = $region25
  $region24: #{caser_query_encoder.1} parent=0 // pred_region
    _
  $region25: #{caser_query_encoder.1} parent=0 // pred_fallthru
    _
  // Predicated region
  $region26: #{caser_query_encoder.1} parent=0 // pred_check
    _
  $region27: #{caser_query_encoder.1} parent=0 // pred_check_branch
    %25 = sbr.rel (0) target = $region29
  $region28: #{caser_query_encoder.1} parent=0 // pred_region
    _
  $region29: #{caser_query_encoder.1} parent=0 // pred_fallthru
    _
  %v27 = vld [vmem:[%s0] sm:$0xff]
  %v28 = vld [vmem:[%s0 + $0x8] sm:$0xff]
  %v29 = vld [vmem:[%s0 + $0x10] sm:$0xff]
  %v30 = vld [vmem:[%s0 + $0x18] sm:$0xff]
  %v31 = vld [vmem:[%s2] sm:$0xf]
  %v32 = vld [vmem:[%s2 + $0x4] sm:$0xf]
  %v33 = vld [vmem:[%s2 + $0x8] sm:$0xf]
  %v34 = vld [vmem:[%s2 + $0xc] sm:$0xf]
  %v35 = vld [vmem:[%s2 + $0x10] sm:$0xf]
  %v36 = vld [vmem:[%s2 + $0x14] sm:$0xf]
  %v37 = vld [vmem:[%s2 + $0x18] sm:$0xf]
  %v38 = vld [vmem:[%s2 + $0x1c] sm:$0xf]
  %v39 = vld [vmem:[%s2 + $0x20] sm:$0xf]
  %v40 = vld [vmem:[%s2 + $0x24] sm:$0xf]
  %v41 = vld [vmem:[%s2 + $0x28] sm:$0xf]
  %v42 = vld [vmem:[%s2 + $0x2c] sm:$0xf]
  %v43 = vld [vmem:[%s2 + $0x30] sm:$0xf]
  %v44 = vld [vmem:[%s2 + $0x34] sm:$0xf]
  %v45 = vld [vmem:[%s2 + $0x38] sm:$0xf]
  %v46 = vld [vmem:[%s2 + $0x3c] sm:$0xf]
  %v47 = vld [vmem:[%s2 + $0x40] sm:$0xf]
  %v48 = vld [vmem:[%s2 + $0x44] sm:$0xf]
  %v49 = vld [vmem:[%s2 + $0x48] sm:$0xf]
  %v50 = vld [vmem:[%s2 + $0x4c] sm:$0xf]
  %v51 = vld [vmem:[%s2 + $0x50] sm:$0xf]
  %v52 = vld [vmem:[%s2 + $0x54] sm:$0xf]
  %v53 = vld [vmem:[%s2 + $0x58] sm:$0xf]
  %v54 = vld [vmem:[%s2 + $0x5c] sm:$0xf]
  %v55 = vld [vmem:[%s2 + $0x60] sm:$0xf]
  %v56 = vld [vmem:[%s2 + $0x64] sm:$0xf]
  %v57 = vld [vmem:[%s2 + $0x68] sm:$0xf]
  %v58 = vld [vmem:[%s2 + $0x6c] sm:$0xf]
  %v59 = vld [vmem:[%s2 + $0x70] sm:$0xf]
  %v60 = vld [vmem:[%s2 + $0x74] sm:$0xf]
  %v61 = vld [vmem:[%s2 + $0x78] sm:$0xf]
  %v62 = vld [vmem:[%s2 + $0x7c] sm:$0xf]
  %v67 = vunpack.c.l.b16 %v27
  %v68 = vunpack.c.h.b16 %v27
  %v69 = vunpack.c.l.b16 %v28
  %v70 = vunpack.c.h.b16 %v28
  %v71 = vunpack.c.l.b16 %v29
  %v72 = vunpack.c.h.b16 %v29
  %v73 = vunpack.c.l.b16 %v30
  %v74 = vunpack.c.h.b16 %v30
  %v75 = vpack.c.b16 %v69, %v67
  %v76 = vpack.c.b16 %v70, %v68
  %v77 = vpack.c.b16 %v73, %v71
  %v78 = vpack.c.b16 %v74, %v72
  %v115 = vunpack.c.l.b16 %v31
  %v116 = vunpack.c.l.b16 %v32
  %v117 = vunpack.c.l.b16 %v33
  %v118 = vunpack.c.l.b16 %v34
  %v119 = vunpack.c.l.b16 %v35
  %v120 = vunpack.c.l.b16 %v36
  %v121 = vunpack.c.l.b16 %v37
  %v122 = vunpack.c.l.b16 %v38
  %v123 = vunpack.c.l.b16 %v39
  %v124 = vunpack.c.l.b16 %v40
  %v125 = vunpack.c.l.b16 %v41
  %v126 = vunpack.c.l.b16 %v42
  %v127 = vunpack.c.l.b16 %v43
  %v128 = vunpack.c.l.b16 %v44
  %v129 = vunpack.c.l.b16 %v45
  %v130 = vunpack.c.l.b16 %v46
  %v131 = vunpack.c.l.b16 %v47
  %v132 = vunpack.c.l.b16 %v48
  %v133 = vunpack.c.l.b16 %v49
  %v134 = vunpack.c.l.b16 %v50
  %v135 = vunpack.c.l.b16 %v51
  %v136 = vunpack.c.l.b16 %v52
  %v137 = vunpack.c.l.b16 %v53
  %v138 = vunpack.c.l.b16 %v54
  %v139 = vunpack.c.l.b16 %v55
  %v140 = vunpack.c.l.b16 %v56
  %v141 = vunpack.c.l.b16 %v57
  %v142 = vunpack.c.l.b16 %v58
  %v143 = vunpack.c.l.b16 %v59
  %v144 = vunpack.c.l.b16 %v60
  %v145 = vunpack.c.l.b16 %v61
  %v146 = vunpack.c.l.b16 %v62
  %v147 = vpack.c.b16 %v116, %v115
  %v148 = vpack.c.b16 %v118, %v117
  %v149 = vpack.c.b16 %v120, %v119
  %v150 = vpack.c.b16 %v122, %v121
  %v151 = vpack.c.b16 %v124, %v123
  %v152 = vpack.c.b16 %v126, %v125
  %v153 = vpack.c.b16 %v128, %v127
  %v154 = vpack.c.b16 %v130, %v129
  %v155 = vpack.c.b16 %v132, %v131
  %v156 = vpack.c.b16 %v134, %v133
  %v157 = vpack.c.b16 %v136, %v135
  %v158 = vpack.c.b16 %v138, %v137
  %v159 = vpack.c.b16 %v140, %v139
  %v160 = vpack.c.b16 %v142, %v141
  %v161 = vpack.c.b16 %v144, %v143
  %v162 = vpack.c.b16 %v146, %v145
  %179 = vmatpush.bf16.msra.mxu0 %v154
  %180 = vmatpush.bf16.msra.mxu0 %v153
  %181 = vmatpush.bf16.msra.mxu0 %v152
  %182 = vmatpush.bf16.msra.mxu0 %v151
  %183 = vmatpush.bf16.msra.mxu0 %v150
  %184 = vmatpush.bf16.msra.mxu0 %v149
  %185 = vmatpush.bf16.msra.mxu0 %v148
  %186 = vmatpush.bf16.msra.mxu0 %v147
  %187 = vmatmul.bf16.gmra.mxu0 %v75
  %v188 = vpop.f32.mrf.mxu0
  %v189 = vadd.f32 0.0, %v188
  %v190 = vpop.f32.mrf.mxu0
  %v191 = vadd.f32 0.0, %v190
  %192 = vmatmul.bf16.gmra.mxu0 %v77
  %v193 = vpop.f32.mrf.mxu0
  %v194 = vadd.f32 0.0, %v193
  %v195 = vpop.f32.mrf.mxu0
  %v196 = vadd.f32 0.0, %v195
  %197 = vdwg.mxu0
  %198 = vmatpush.bf16.msra.mxu0 %v162
  %199 = vmatpush.bf16.msra.mxu0 %v161
  %200 = vmatpush.bf16.msra.mxu0 %v160
  %201 = vmatpush.bf16.msra.mxu0 %v159
  %202 = vmatpush.bf16.msra.mxu0 %v158
  %203 = vmatpush.bf16.msra.mxu0 %v157
  %204 = vmatpush.bf16.msra.mxu0 %v156
  %205 = vmatpush.bf16.msra.mxu0 %v155
  %206 = vmatmul.bf16.gmra.mxu0 %v76
  %v207 = vpop.f32.mrf.mxu0
  %v208 = vadd.f32 %v189, %v207
  %v209 = vpop.f32.mrf.mxu0
  %v210 = vadd.f32 %v191, %v209
  %211 = vmatmul.bf16.gmra.mxu0 %v78
  %v212 = vpop.f32.mrf.mxu0
  %v213 = vadd.f32 %v194, %v212
  %v214 = vpop.f32.mrf.mxu0
  %v215 = vadd.f32 %v196, %v214
  %216 = vdwg.mxu0
  %v217 = vld [vmem:[%s3] sm:$0xff]
  %v218 = vadd.f32 %v208, %v217
  %v219 = vadd.f32 %v210, %v217
  %v220 = vadd.f32 %v213, %v217
  %v221 = vadd.f32 %v215, %v217
  %vm222 = vcmask 261120
  %v223 = vsel %vm222, %v218, -inf
  %v224 = vrot.slane %v223, 4
  %v225 = vmax.f32 %v223, %v224
  %v226 = vrot.slane %v225, 2
  %v227 = vmax.f32 %v225, %v226
  %v228 = vrot.slane %v227, 1
  %v229 = vmax.f32 %v227, %v228
  %v230 = vsel %vm222, %v219, -inf
  %v231 = vrot.slane %v230, 4
  %v232 = vmax.f32 %v230, %v231
  %v233 = vrot.slane %v232, 2
  %v234 = vmax.f32 %v232, %v233
  %v235 = vrot.slane %v234, 1
  %v236 = vmax.f32 %v234, %v235
  %v237 = vsel %vm222, %v220, -inf
  %v238 = vrot.slane %v237, 4
  %v239 = vmax.f32 %v237, %v238
  %v240 = vrot.slane %v239, 2
  %v241 = vmax.f32 %v239, %v240
  %v242 = vrot.slane %v241, 1
  %v243 = vmax.f32 %v241, %v242
  %v244 = vsel %vm222, %v221, -inf
  %v245 = vrot.slane %v244, 4
  %v246 = vmax.f32 %v244, %v245
  %v247 = vrot.slane %v246, 2
  %v248 = vmax.f32 %v246, %v247
  %v249 = vrot.slane %v248, 1
  %v250 = vmax.f32 %v248, %v249
  %v251 = vmax.f32 %v229, 0.0
  %v252 = vmax.f32 %v236, 0.0
  %v253 = vmax.f32 %v243, 0.0
  %v254 = vmax.f32 %v250, 0.0
  %v255 = vld [vmem:[%s1] sm:$0xf]
  %v256 = vld [vmem:[%s4] sm:$0xf]
  %v257 = vld [vmem:[%s4 + $0x4] sm:$0xf]
  %v258 = vld [vmem:[%s4 + $0x8] sm:$0xf]
  %v259 = vld [vmem:[%s4 + $0xc] sm:$0xf]
  %v260 = vld [vmem:[%s4 + $0x10] sm:$0xf]
  %v261 = vld [vmem:[%s4 + $0x14] sm:$0xf]
  %v262 = vld [vmem:[%s4 + $0x18] sm:$0xf]
  %v263 = vld [vmem:[%s4 + $0x1c] sm:$0xf]
  %v264 = vld [vmem:[%s4 + $0x20] sm:$0xf]
  %v265 = vld [vmem:[%s4 + $0x24] sm:$0xf]
  %v266 = vld [vmem:[%s4 + $0x28] sm:$0xf]
  %v267 = vld [vmem:[%s4 + $0x2c] sm:$0xf]
  %v268 = vld [vmem:[%s4 + $0x30] sm:$0xf]
  %v269 = vld [vmem:[%s4 + $0x34] sm:$0xf]
  %v270 = vld [vmem:[%s4 + $0x38] sm:$0xf]
  %v271 = vld [vmem:[%s4 + $0x3c] sm:$0xf]
  %v272 = vld [vmem:[%s4 + $0x40] sm:$0xf]
  %v273 = vld [vmem:[%s4 + $0x44] sm:$0xf]
  %v274 = vld [vmem:[%s4 + $0x48] sm:$0xf]
  %v275 = vld [vmem:[%s4 + $0x4c] sm:$0xf]
  %v276 = vld [vmem:[%s4 + $0x50] sm:$0xf]
  %v277 = vld [vmem:[%s4 + $0x54] sm:$0xf]
  %v278 = vld [vmem:[%s4 + $0x58] sm:$0xf]
  %v279 = vld [vmem:[%s4 + $0x5c] sm:$0xf]
  %v280 = vld [vmem:[%s4 + $0x60] sm:$0xf]
  %v281 = vld [vmem:[%s4 + $0x64] sm:$0xf]
  %v282 = vld [vmem:[%s4 + $0x68] sm:$0xf]
  %v283 = vld [vmem:[%s4 + $0x6c] sm:$0xf]
  %v284 = vld [vmem:[%s4 + $0x70] sm:$0xf]
  %v285 = vld [vmem:[%s4 + $0x74] sm:$0xf]
  %v286 = vld [vmem:[%s4 + $0x78] sm:$0xf]
  %v287 = vld [vmem:[%s4 + $0x7c] sm:$0xf]
  %v288 = vpack.c.bf16 %v251, %v251
  %v289 = vpack.c.bf16 %v252, %v252
  %v290 = vpack.c.bf16 %v253, %v253
  %v291 = vpack.c.bf16 %v254, %v254
  %v292 = vld [vmem:[%s5] sm:$0xf]
  %v293 = vld [vmem:[%s5 + $0x4] sm:$0xf]
  %v294 = vld [vmem:[%s5 + $0x8] sm:$0xf]
  %v295 = vld [vmem:[%s5 + $0xc] sm:$0xf]
  %v300 = vunpack.c.l.b16 %v288
  %v301 = vunpack.c.l.b16 %v289
  %v302 = vunpack.c.l.b16 %v290
  %v303 = vunpack.c.l.b16 %v291
  %vm304 = vcmask 1041409
  %v305 = vsel %vm304, %v301, %v300
  %vm306 = vcmask 1042434
  %v307 = vsel %vm306, %v302, %v305
  %vm308 = vcmask 1043459
  %v309 = vsel %vm308, %v303, %v307
  %v310 = vpack.c.b16 %v309, %v309
  %v315 = vunpack.c.l.b16 %v292
  %v316 = vunpack.c.l.b16 %v293
  %v317 = vunpack.c.l.b16 %v294
  %v318 = vunpack.c.l.b16 %v295
  %v319 = vpack.c.b16 %v316, %v315
  %v320 = vpack.c.b16 %v318, %v317
  %v324 = vsel %vm222, %v310, 0
  %326 = vmatpush.bf16.msra.mxu0 0
  %327 = vmatpush.bf16.msra.mxu0 0
  %328 = vmatpush.bf16.msra.mxu0 0
  %329 = vmatpush.bf16.msra.mxu0 0
  %330 = vmatpush.bf16.msra.mxu0 0
  %331 = vmatpush.bf16.msra.mxu0 0
  %332 = vmatpush.bf16.msra.mxu0 %v320
  %333 = vmatpush.bf16.msra.mxu0 %v319
  %334 = vmatmul.bf16.gmra.mxu0 %v324
  %v335 = vpop.f32.mrf.mxu0
  %v336 = vadd.f32 0.0, %v335
  %v337 = vpop.f32.mrf.mxu0
  %338 = vdwg.mxu0
  %340 = vst [vmem:[#allocation1] ss:$4 sm:$0xff] %v255
  %v341 = vld.sshfl [vmem:[#allocation1] sm:$0xff pattern:$0x73625140]
  %v342 = vld.sshfl [vmem:[#allocation1 + $0x8] sm:$0xff pattern:$0x73625140]
  %v377 = vunpack.c.l.b16 %v256
  %v378 = vunpack.c.l.b16 %v257
  %v379 = vunpack.c.l.b16 %v258
  %v380 = vunpack.c.l.b16 %v259
  %v381 = vunpack.c.l.b16 %v260
  %v382 = vunpack.c.l.b16 %v261
  %v383 = vunpack.c.l.b16 %v262
  %v384 = vunpack.c.l.b16 %v263
  %v385 = vunpack.c.l.b16 %v264
  %v386 = vunpack.c.l.b16 %v265
  %v387 = vunpack.c.l.b16 %v266
  %v388 = vunpack.c.l.b16 %v267
  %v389 = vunpack.c.l.b16 %v268
  %v390 = vunpack.c.l.b16 %v269
  %v391 = vunpack.c.l.b16 %v270
  %v392 = vunpack.c.l.b16 %v271
  %v393 = vunpack.c.l.b16 %v272
  %v394 = vunpack.c.l.b16 %v273
  %v395 = vunpack.c.l.b16 %v274
  %v396 = vunpack.c.l.b16 %v275
  %v397 = vunpack.c.l.b16 %v276
  %v398 = vunpack.c.l.b16 %v277
  %v399 = vunpack.c.l.b16 %v278
  %v400 = vunpack.c.l.b16 %v279
  %v401 = vunpack.c.l.b16 %v280
  %v402 = vunpack.c.l.b16 %v281
  %v403 = vunpack.c.l.b16 %v282
  %v404 = vunpack.c.l.b16 %v283
  %v405 = vunpack.c.l.b16 %v284
  %v406 = vunpack.c.l.b16 %v285
  %v407 = vunpack.c.l.b16 %v286
  %v408 = vunpack.c.l.b16 %v287
  %v409 = vpack.c.b16 %v378, %v377
  %v410 = vpack.c.b16 %v380, %v379
  %v411 = vpack.c.b16 %v382, %v381
  %v412 = vpack.c.b16 %v384, %v383
  %v413 = vpack.c.b16 %v386, %v385
  %v414 = vpack.c.b16 %v388, %v387
  %v415 = vpack.c.b16 %v390, %v389
  %v416 = vpack.c.b16 %v392, %v391
  %v417 = vpack.c.b16 %v394, %v393
  %v418 = vpack.c.b16 %v396, %v395
  %v419 = vpack.c.b16 %v398, %v397
  %v420 = vpack.c.b16 %v400, %v399
  %v421 = vpack.c.b16 %v402, %v401
  %v422 = vpack.c.b16 %v404, %v403
  %v423 = vpack.c.b16 %v406, %v405
  %v424 = vpack.c.b16 %v408, %v407
  %441 = vmatpush.bf16.msra.mxu0 %v416
  %442 = vmatpush.bf16.msra.mxu0 %v415
  %443 = vmatpush.bf16.msra.mxu0 %v414
  %444 = vmatpush.bf16.msra.mxu0 %v413
  %445 = vmatpush.bf16.msra.mxu0 %v412
  %446 = vmatpush.bf16.msra.mxu0 %v411
  %447 = vmatpush.bf16.msra.mxu0 %v410
  %448 = vmatpush.bf16.msra.mxu0 %v409
  %449 = vmatmul.bf16.gmra.mxu0 %v341
  %v450 = vpop.f32.mrf.mxu0
  %v451 = vadd.f32 %v336, %v450
  %v452 = vpop.f32.mrf.mxu0
  %453 = vdwg.mxu0
  %454 = vmatpush.bf16.msra.mxu0 %v424
  %455 = vmatpush.bf16.msra.mxu0 %v423
  %456 = vmatpush.bf16.msra.mxu0 %v422
  %457 = vmatpush.bf16.msra.mxu0 %v421
  %458 = vmatpush.bf16.msra.mxu0 %v420
  %459 = vmatpush.bf16.msra.mxu0 %v419
  %460 = vmatpush.bf16.msra.mxu0 %v418
  %461 = vmatpush.bf16.msra.mxu0 %v417
  %462 = vmatmul.bf16.gmra.mxu0 %v342
  %v463 = vpop.f32.mrf.mxu0
  %v464 = vadd.f32 %v451, %v463
  %v465 = vpop.f32.mrf.mxu0
  %466 = vdwg.mxu0
  %v467 = vld [vmem:[%s6] sm:$0x1]
  %v469 = vperm.slane %v467, 0
  %v471 = vadd.f32 %v464, %v469
  %v472 = vmax.f32 %v471, 0.0
  %vm473 = vcmask 257024
  %474 = vst.msk [vmem:[%s7] sm:$0xf] %vm473, %v472
  // Predicated region
  $region30: #{caser_query_encoder.1} parent=0 // pred_check
    _
  $region31: #{caser_query_encoder.1} parent=0 // pred_check_branch
    %476 = sbr.rel (0) target = $region33
  $region32: #{caser_query_encoder.1} parent=0 // pred_region
    _
  $region33: #{caser_query_encoder.1} parent=0 // pred_fallthru
    _
  // Predicated region
  $region34: #{caser_query_encoder.1} parent=0 // pred_check
    _
  $region35: #{caser_query_encoder.1} parent=0 // pred_check_branch
    %478 = sbr.rel (0) target = $region37
  $region36: #{caser_query_encoder.1} parent=0 // pred_region
    _
  $region37: #{caser_query_encoder.1} parent=0 // pred_fallthru
    _

</llo_original>
